<compile_context>
chip_gen: v6e
topology: v6e:2x2x1
jax: 0.10.0
libtpu: 0.0.40
codegen_flags: <defaults>
</compile_context>

<pallas_src>
import jax
import jax.numpy as jnp
from jax.experimental import pallas as pl
from jax.experimental.pallas import tpu as pltpu


# ----------------------------------------------------------------------------
# Kernel: one MXU pass + bias add (f32 accumulate), shared by both paths.
# ----------------------------------------------------------------------------
def _proj_bias_kernel(x_ref, w_ref, b_ref, o_ref):
    # x_ref: (tg, K)   w_ref: (K, N)   b_ref: (1, N) f32   o_ref: (tg, N)
    acc = jnp.dot(x_ref[...], w_ref[...], preferred_element_type=jnp.float32)
    o_ref[...] = (acc + b_ref[...]).astype(o_ref.dtype)


# ----------------------------------------------------------------------------
# Tiling / VMEM budgeting.
# ----------------------------------------------------------------------------
def _round_up(x, m):
    return ((x + m - 1) // m) * m


# Conservative budget that fits every generation (v7x has only 64 MiB physical
# VMEM per TensorCore; leave room for compiler-internal scratch).
_VMEM_BUDGET = int(0.75 * 48 * 1024 * 1024)


def _choose_row_tile(G, K, N, x_bytes, w_bytes, block_rows):
    """Pick the row tile tg (multiple of 8) and an explicit vmem limit.

    Per-step VMEM ~= 2*tg*(K + N)*x_bytes   (double-buffered x rows + out rows)
                   + K*N*w_bytes + 4*N      (single-buffered resident weight + bias)
    Also caps tg so the grid has >=2 steps (v7x megacore sharding) when G allows.
    """
    fixed = K * N * w_bytes + 4 * N
    per_row = 2 * (K + N) * max(x_bytes, 4)          # slightly pessimistic
    cap = max(8, ((_VMEM_BUDGET - fixed) // per_row) // 8 * 8)
    half = _round_up(pl.cdiv(G, 2), 8)               # >=2 grid steps when G >= 16
    tg = max(8, min(block_rows, cap, half))
    if tg >= G:
        tg = G                                       # tiny inputs: one exact block
    est = fixed + per_row * tg + 4 * N
    vmem_limit = int(min(max(est * 3 // 2, 32 * 1024 * 1024), 64 * 1024 * 1024))
    return tg, vmem_limit


# ----------------------------------------------------------------------------
# Expanded (unfold-fused) projection weight.
# ----------------------------------------------------------------------------
def _expand_weight(weight, bias, patch_size, width, embed_size):
    """weight: (p*p, E) (transpose of the torch Linear weight); bias: (E,).

    Returns Wg: (p*width, nw*E) with Wg[r*width + j*p + c, j*E + n] = weight[r*p+c, n]
    and bg: (1, nw*E) f32 (bias tiled per patch column).
    """
    p = patch_size
    nw = width // p
    w3 = weight.reshape(p, p, embed_size)                     # (r, c, n)
    eye = jnp.eye(nw, dtype=weight.dtype)                     # (j, k)
    wg = jnp.einsum("rcn,jk->rjckn", w3, eye)                 # (p, nw, p, nw, E)
    wg = wg.reshape(p * width, nw * embed_size)
    bg = jnp.tile(bias.astype(jnp.float32), nw).reshape(1, nw * embed_size)
    return wg, bg


# ----------------------------------------------------------------------------
# Factory: builds the projection matrices ONCE, returns a forward(x) closure.
# ----------------------------------------------------------------------------
def make_patch_embedding(weight, bias, patch_size, embed_size, img_size, *,
                         out_dtype=None, block_rows=512,
                         max_fused_weight_bytes=12 * 1024 * 1024):
    """weight: (p*p, E) = torch Linear weight transposed; bias: (E,)."""
    H, W = img_size
    p = patch_size
    # TODO(synk): torch unfold silently drops a trailing remainder when p does
    # not divide H/W; this fused path requires exact tiling and raises instead.
    assert H % p == 0 and W % p == 0, "patch_size must divide H and W"
    nh, nw = H // p, W // p
    Kg, Ng = p * W, nw * embed_size
    w_bytes = jnp.dtype(weight.dtype).itemsize

    use_fused = Kg * Ng * w_bytes <= max_fused_weight_bytes
    if use_fused:
        # Built once per weight update (hoisted out of the per-call path).
        wg, bg = _expand_weight(weight, bias, p, W, embed_size)
    else:
        # ViT-scale guard: the block-diagonal weight grows as nw^2 * p^2 * E and
        # cannot stay VMEM-resident.  Fall back to explicit patch extraction +
        # a plain resident-weight projection (one extra HBM pass over patches).
        # TODO(synk): in-kernel de-interleave of the (tg, p, nw, p) strip would
        # restore the single-HBM-pass property here.
        w2 = weight
        b2 = bias.astype(jnp.float32).reshape(1, embed_size)

    def _call(rows2d, w, b, K, N, out_dt):
        G = rows2d.shape[0]
        tg, vmem_limit = _choose_row_tile(G, K, N,
                                          jnp.dtype(rows2d.dtype).itemsize,
                                          jnp.dtype(w.dtype).itemsize,
                                          block_rows)
        return pl.pallas_call(
            _proj_bias_kernel,
            out_shape=jax.ShapeDtypeStruct((G, N), out_dt),
            grid_spec=pltpu.PrefetchScalarGridSpec(
                num_scalar_prefetch=0,
                grid=(pl.cdiv(G, tg),),
                in_specs=[
                    # streamed row strips (double-buffered by default)
                    pl.BlockSpec((tg, K), lambda i: (i, 0)),
                    # resident weight / bias: constant index_map -> fetched once;
                    # single-buffered to reclaim VMEM for larger row tiles.
                    pl.BlockSpec((K, N), lambda i: (0, 0),
                                 pipeline_mode=pl.Buffered(1)),
                    pl.BlockSpec((1, N), lambda i: (0, 0),
                                 pipeline_mode=pl.Buffered(1)),
                ],
                out_specs=pl.BlockSpec((tg, N), lambda i: (i, 0)),
            ),
            compiler_params=pltpu.CompilerParams(
                dimension_semantics=("parallel",),
                vmem_limit_bytes=vmem_limit),
        )(rows2d, w, b)

    def forward(x):
        B, F, H_, W_ = x.shape
        assert (H_, W_) == (H, W), "input spatial size must match img_size"
        out_dt = out_dtype or x.dtype
        if use_fused:
            G = B * F * nh
            xg = x.reshape(G, Kg)                      # free row-major reshape
            out = _call(xg, wg, bg, Kg, Ng, out_dt)
            # (G, nw*E) is row-major identical to (B, F, nh*nw, E).
            return out.reshape(B, F, nh * nw, embed_size)
        else:
            Gp = B * F * nh * nw
            patches = x.reshape(B, F, nh, p, nw, p).transpose(
                0, 1, 2, 4, 3, 5).reshape(Gp, p * p)
            out = _call(patches, w2, b2, p * p, embed_size, out_dt)
            return out.reshape(B, F, nh * nw, embed_size)

    return forward


if __name__ == "__main__":
    # Small shapes consistent with the module: batch=2, num_frames=4,
    # img_size=(16,16), patch_size=4 -> num_patches=16; embed_size=32.
    batch, frames, H, W = 2, 4, 16, 16
    patch_size, embed_size = 4, 32

    key = jax.random.PRNGKey(0)
    kx, kw, kb = jax.random.split(key, 3)
    x = jax.random.normal(kx, (batch, frames, H, W), dtype=jnp.float32)
    # torch Linear weight is (E, p*p); we store its transpose directly.
    weight = jax.random.normal(kw, (patch_size * patch_size, embed_size),
                               dtype=jnp.float32) * 0.05
    bias = jax.random.normal(kb, (embed_size,), dtype=jnp.float32) * 0.01

    fwd = make_patch_embedding(weight, bias, patch_size, embed_size, (H, W))
    out = jax.block_until_ready(fwd(x))

    # Pure-JAX reference (matches torch unfold + Linear semantics).
    p = patch_size
    nh, nw = H // p, W // p
    patches_ref = x.reshape(batch, frames, nh, p, nw, p).transpose(
        0, 1, 2, 4, 3, 5).reshape(batch, frames, nh * nw, p * p)
    ref = patches_ref @ weight + bias

    assert out.shape == (batch, frames, nh * nw, embed_size)
    assert jnp.allclose(out, ref, atol=1e-4, rtol=1e-4)

    print("KERNEL_OK")
</pallas_src>

<mosaic_0001>
module attributes {stable_mosaic.version = 11 : i64} {
  func.func @_proj_bias_kernel(%arg0: i32, %arg1: memref<16x64xf32, #tpu.memory_space<vmem>>, %arg2: memref<64x128xf32, #tpu.memory_space<vmem>>, %arg3: memref<1x128xf32, #tpu.memory_space<vmem>>, %arg4: memref<16x128xf32, #tpu.memory_space<vmem>>) attributes {dimension_semantics = [#tpu.dimension_semantics<parallel>], iteration_bounds = array<i64: 2>, scalar_prefetch = 0 : i64, scratch_operands = 0 : i64, tpu.core_type = #tpu.core_type<tc>, window_params = [{transform_indices = @transform_0, window_bounds = array<i64: 16, 64>}, {pipeline_mode = #tpu.pipeline_mode<synchronous>, transform_indices = @transform_1, window_bounds = array<i64: 64, 128>}, {pipeline_mode = #tpu.pipeline_mode<synchronous>, transform_indices = @transform_2, window_bounds = array<i64: 1, 128>}, {transform_indices = @transform_3, window_bounds = array<i64: 16, 128>}]} {
    %c0 = arith.constant 0 : index
    %c0_0 = arith.constant 0 : index
    %0 = vector.load %arg1[%c0, %c0_0] : memref<16x64xf32, #tpu.memory_space<vmem>>, vector<16x64xf32>
    %c0_1 = arith.constant 0 : index
    %c0_2 = arith.constant 0 : index
    %1 = vector.load %arg2[%c0_1, %c0_2] : memref<64x128xf32, #tpu.memory_space<vmem>>, vector<64x128xf32>
    %cst = arith.constant dense<0.000000e+00> : vector<16x128xf32>
    %2 = tpu.matmul %0, %1, %cst {dimension_numbers = #tpu.dot_dimension_numbers<[1], [0], [0], [1], [0, 0, 1, 1], [], []>} : vector<16x64xf32>, vector<64x128xf32>, vector<16x128xf32> -> vector<16x128xf32>
    %c0_3 = arith.constant 0 : index
    %c0_4 = arith.constant 0 : index
    %3 = vector.load %arg3[%c0_3, %c0_4] : memref<1x128xf32, #tpu.memory_space<vmem>>, vector<1x128xf32>
    %4 = vector.broadcast %3 : vector<1x128xf32> to vector<16x128xf32>
    %5 = arith.addf %2, %4 : vector<16x128xf32>
    %c0_5 = arith.constant 0 : index
    %c0_6 = arith.constant 0 : index
    %6 = vector.load %arg4[%c0_5, %c0_6] : memref<16x128xf32, #tpu.memory_space<vmem>>, vector<16x128xf32>
    tpu.vector_store %arg4[%c0_5, %c0_6], %5 {strides = array<i32>} : memref<16x128xf32, #tpu.memory_space<vmem>>, vector<16x128xf32>,
    return
  }
  func.func @transform_0(%arg0: i32) -> (i32, i32) {
    %c0_i32 = arith.constant 0 : i32
    %c0_i32_0 = arith.constant 0 : i32
    return %arg0, %c0_i32 : i32, i32
  }
  func.func @transform_1(%arg0: i32) -> (i32, i32) {
    %c0_i32 = arith.constant 0 : i32
    %c0_i32_0 = arith.constant 0 : i32
    %c0_i32_1 = arith.constant 0 : i32
    return %c0_i32, %c0_i32_0 : i32, i32
  }
  func.func @transform_2(%arg0: i32) -> (i32, i32) {
    %c0_i32 = arith.constant 0 : i32
    %c0_i32_0 = arith.constant 0 : i32
    %c0_i32_1 = arith.constant 0 : i32
    return %c0_i32, %c0_i32_0 : i32, i32
  }
  func.func @transform_3(%arg0: i32) -> (i32, i32) {
    %c0_i32 = arith.constant 0 : i32
    %c0_i32_0 = arith.constant 0 : i32
    return %arg0, %c0_i32 : i32, i32
  }
}

</mosaic_0001>

<llo_original>
// kernel: tpu_custom_call.1
$region0: #{tpu_custom_call.1}
  #allocation0 [shape = 'u32[]', space=smem, size = 0x4, offset = 0x4, fixed_abs, tag = 'smem constant byte address 0x4 - core index']
  #allocation1 [shape = 'u32[144,128]{1,0:T(1,128)}', space=vmem, size = 0x12000, scoped, tag = 'internal scratch']
  %s0 = inlined_call_operand.hbm [shape: f32[32,64], index: 0, kind: input, shape index: {}]
  %s1 = inlined_call_operand.hbm [shape: f32[64,128], index: 1, kind: input, shape index: {}]
  %s2 = inlined_call_operand.vmem [shape: f32[1,128], index: 2, kind: input, shape index: {}]
  %s3 = inlined_call_operand.hbm [shape: f32[32,128], index: 3, kind: output, shape index: {}]
  %s4 = sld [smem:[#allocation0]]
  $region53: #{tpu_custom_call.1} parent=0
    _
  %s6 = ssub.s32 1, %s4
  %s7 = scalar_select 0, %s6, %s4
  $region1: #{tpu_custom_call.1} parent=0
    #allocation2 [shape = 'u8[16384]{0}', space=vmem, size = 0x4000, scoped, tag = 'input window, operand 0']
    #allocation3 [shape = 's32[2]{0}', space=sflag, size = 0x8, scoped, tag = 'scoped memory for tpu_custom_call.1']
    #allocation4 [shape = 's32[2]{0}', space=sflag, size = 0x8, scoped, tag = 'scoped memory for tpu_custom_call.1']
    #allocation5 [shape = 'u8[32768]{0}', space=vmem, size = 0x8000, scoped, tag = 'input window, operand 1, single buffered']
    #allocation6 [shape = 's32[1]{0}', space=sflag, size = 0x4, scoped, tag = 'scoped memory for tpu_custom_call.1']
    #allocation7 [shape = 'u8[16384]{0}', space=vmem, size = 0x4000, scoped, tag = 'output window, operand 0']
    %8 = vsyncpa [#allocation3], 0
    %s9 = scalar_lea.sflag [#allocation3], 1
    %10 = vsyncpa %s9, 0
    %11 = vsyncpa [#allocation6], 0
    %12 = vsyncpa [#allocation4], 0
    %s13 = scalar_lea.sflag [#allocation4], 1
    %14 = vsyncpa %s13, 0
    loop: start=0, step=1, limit=4
    $region2: #{tpu_custom_call.1} parent=1 // loop_pre_header
      _
    $region3: #{tpu_custom_call.1} parent=1 // loop_header
      %s16 = sphi 0, %s20
      %p17 = scmp.ge.s32.totalorder %s16, 4
      %s26 = sphi 0, %s28
      %s29 = sphi 0, %s26
      %s30 = sphi 0, %s29
      %s46 = sphi 0, %s30
      %s50 = sphi 0, %s50
      %s52 = sphi 0, %s50
      %s53 = sphi 0, %s52
      %s67 = sphi 0, %s53
      %s71 = sphi 0, %s71
      %s73 = sphi 0, %s71
      %s74 = sphi 0, %s73
      %s88 = sphi 0, %s74
      %s94 = sphi 0, %s96
      %s97 = sphi 0, %s94
      %s98 = sphi 0, %s97
      %s114 = sphi 0, %s98
    $region4: #{tpu_custom_call.1} parent=1 // loop_header_branch
      %19 = sbr.rel (%p17) target = $region8
    $region5: #{tpu_custom_call.1} parent=1 // loop_body
      %s21 = ssub.s32 %s16, 1
      %s22 = ssub.s32 %s16, 2
      %s23 = sadd.s32 %s16, 1
      %s24 = ssub.s32 %s16, %s23
      %p25 = scmp.eq.s32.totalorder %s24, 0
      %s27 = sadd.s32 %s26, 1
      %s28 = scalar_select %p25, %s26, %s27
      %p31 = pneg %p25
      %p32 = scmp.eq.s32.totalorder %s16, 1
      %p33 = por %p31, %p32
      %p34 = scmp.ne.s32.totalorder %s26, %s29
      %p35 = scmp.eq.s32.totalorder %s16, 0
      %p36 = por %p34, %p35
      %p37 = scmp.ne.s32.totalorder %s26, %s29
      %p38 = scmp.eq.s32.totalorder %s21, 1
      %p39 = por %p37, %p38
      %p40 = scmp.ne.s32.totalorder %s29, %s30
      %p41 = scmp.eq.s32.totalorder %s21, 0
      %p42 = por %p40, %p41
      %p43 = scmp.ne.s32.totalorder %s29, %s30
      %p44 = scmp.eq.s32.totalorder %s22, 1
      %p45 = por %p43, %p44
      %p47 = scmp.ne.s32.totalorder %s30, %s46
      %p48 = scmp.eq.s32.totalorder %s22, 0
      %p49 = por %p47, %p48
      %s51 = sadd.s32 %s50, 1
      %p54 = scmp.eq.s32.totalorder %s16, 1
      %p55 = scmp.ne.s32.totalorder %s50, %s52
      %p56 = scmp.eq.s32.totalorder %s16, 0
      %p57 = por %p55, %p56
      %p58 = scmp.ne.s32.totalorder %s50, %s52
      %p59 = scmp.eq.s32.totalorder %s21, 1
      %p60 = por %p58, %p59
      %p61 = scmp.ne.s32.totalorder %s52, %s53
      %p62 = scmp.eq.s32.totalorder %s21, 0
      %p63 = por %p61, %p62
      %p64 = scmp.ne.s32.totalorder %s52, %s53
      %p65 = scmp.eq.s32.totalorder %s22, 1
      %p66 = por %p64, %p65
      %p68 = scmp.ne.s32.totalorder %s53, %s67
      %p69 = scmp.eq.s32.totalorder %s22, 0
      %p70 = por %p68, %p69
      %s72 = sadd.s32 %s71, 1
      %p75 = scmp.eq.s32.totalorder %s16, 1
      %p76 = scmp.ne.s32.totalorder %s71, %s73
      %p77 = scmp.eq.s32.totalorder %s16, 0
      %p78 = por %p76, %p77
      %p79 = scmp.ne.s32.totalorder %s71, %s73
      %p80 = scmp.eq.s32.totalorder %s21, 1
      %p81 = por %p79, %p80
      %p82 = scmp.ne.s32.totalorder %s73, %s74
      %p83 = scmp.eq.s32.totalorder %s21, 0
      %p84 = por %p82, %p83
      %p85 = scmp.ne.s32.totalorder %s73, %s74
      %p86 = scmp.eq.s32.totalorder %s22, 1
      %p87 = por %p85, %p86
      %p89 = scmp.ne.s32.totalorder %s74, %s88
      %p90 = scmp.eq.s32.totalorder %s22, 0
      %p91 = por %p89, %p90
      %s92 = ssub.s32 %s16, %s23
      %p93 = scmp.eq.s32.totalorder %s92, 0
      %s95 = sadd.s32 %s94, 1
      %s96 = scalar_select %p93, %s94, %s95
      %p99 = pneg %p93
      %p100 = scmp.eq.s32.totalorder %s16, 1
      %p101 = por %p99, %p100
      %p102 = scmp.ne.s32.totalorder %s94, %s97
      %p103 = scmp.eq.s32.totalorder %s16, 0
      %p104 = por %p102, %p103
      %p105 = scmp.ne.s32.totalorder %s94, %s97
      %p106 = scmp.eq.s32.totalorder %s21, 1
      %p107 = por %p105, %p106
      %p108 = scmp.ne.s32.totalorder %s97, %s98
      %p109 = scmp.eq.s32.totalorder %s21, 0
      %p110 = por %p108, %p109
      %p111 = scmp.ne.s32.totalorder %s97, %s98
      %p112 = scmp.eq.s32.totalorder %s22, 1
      %p113 = por %p111, %p112
      %p115 = scmp.ne.s32.totalorder %s98, %s114
      %p116 = scmp.eq.s32.totalorder %s22, 0
      %p117 = por %p115, %p116
      %p118 = scmp.le.s32.totalorder 1, %s16
      %p119 = scmp.lt.s32.totalorder %s16, 3
      %p120 = pnand %p118, %p119
      %p121 = pneg %p120
      // Predicated region
      $region9: #{tpu_custom_call.1} parent=5 // pred_check
        _
      $region10: #{tpu_custom_call.1} parent=5 // pred_check_branch
        %123 = sbr.rel (%p120) target = $region12
      $region11: #{tpu_custom_call.1} parent=5 // pred_region
        %s124 = ssub.s32 %s16, 1
        // Predicated region
        $region13: #{tpu_custom_call.1} parent=11 // pred_check
          %p125 = pneg %p63
        $region14: #{tpu_custom_call.1} parent=11 // pred_check_branch
          %127 = sbr.rel (%p125) target = $region16
        $region15: #{tpu_custom_call.1} parent=11 // pred_region
          %s129 = ssub.s32 1024, 1024
          %130 = vsyncadd [#allocation6], %s129
          %s131 = sshll.u32 [#allocation5], 4
          %s132 = int_to_ptr.vmem [resolvable:$true] %s131
          %137 = dma.hbm_to_vmem [thread:$0]  %s1, 1024, %s132, [#allocation6], 128, 128, 8
        $region16: #{tpu_custom_call.1} parent=11 // pred_fallthru
          _
        // Predicated region
        $region17: #{tpu_custom_call.1} parent=11 // pred_check
          %p138 = pneg %p84
        $region18: #{tpu_custom_call.1} parent=11 // pred_check_branch
          %140 = sbr.rel (%p138) target = $region20
        $region19: #{tpu_custom_call.1} parent=11 // pred_region
          _
        $region20: #{tpu_custom_call.1} parent=11 // pred_fallthru
          _
      $region12: #{tpu_custom_call.1} parent=5 // pred_fallthru
        _
      %p141 = scmp.lt.s32.totalorder %s16, 2
      // Predicated region
      $region21: #{tpu_custom_call.1} parent=5 // pred_check
        %p142 = pneg %p141
      $region22: #{tpu_custom_call.1} parent=5 // pred_check_branch
        %144 = sbr.rel (%p142) target = $region24
      $region23: #{tpu_custom_call.1} parent=5 // pred_region
        // Predicated region
        $region25: #{tpu_custom_call.1} parent=23 // pred_check
          %p145 = pneg %p36
        $region26: #{tpu_custom_call.1} parent=23 // pred_check_branch
          %147 = sbr.rel (%p145) target = $region28
        $region27: #{tpu_custom_call.1} parent=23 // pred_region
          %s148 = sand.u32 %s26, 1
          %s149 = scalar_lea.sflag [#allocation3], %s148
          %s150 = sand.u32 %s26, 1
          %s151 = smul.addr %s150, 16
          %s152 = scalar_lea.vmem [#allocation2], %s151
          %s153 = smul.u32 2, %s16
          %s155 = ssub.s32 256, 256
          %156 = vsyncadd %s149, %s155
          %s157 = smul.addr %s153, 128
          %s158 = scalar_lea.hbm %s0, %s157
          %s159 = sshll.u32 %s152, 4
          %s160 = int_to_ptr.vmem [resolvable:$true] %s159
          %165 = dma.hbm_to_vmem [thread:$0]  %s158, 256, %s160, %s149, 128, 128, 8
        $region28: #{tpu_custom_call.1} parent=23 // pred_fallthru
          _
      $region24: #{tpu_custom_call.1} parent=5 // pred_fallthru
        _
      %p166 = scmp.le.s32.totalorder 1, %s16
      %p167 = scmp.lt.s32.totalorder %s16, 3
      %p168 = pnand %p166, %p167
      %p169 = pneg %p168
      // Predicated region
      $region29: #{tpu_custom_call.1} parent=5 // pred_check
        _
      $region30: #{tpu_custom_call.1} parent=5 // pred_check_branch
        %171 = sbr.rel (%p168) target = $region32
      $region31: #{tpu_custom_call.1} parent=5 // pred_region
        %s172 = ssub.s32 %s16, 1
        %s173 = sand.u32 %s29, 1
        %s174 = scalar_lea.sflag [#allocation3], %s173
        %s175 = sand.u32 %s29, 1
        %s176 = smul.addr %s175, 16
        %s177 = scalar_lea.vmem [#allocation2], %s176
        // Predicated region
        $region33: #{tpu_custom_call.1} parent=31 // pred_check
          %p178 = pneg %p42
        $region34: #{tpu_custom_call.1} parent=31 // pred_check_branch
          %180 = sbr.rel (%p178) target = $region36
        $region35: #{tpu_custom_call.1} parent=31 // pred_region
          %181 = dma.done %s174, 256
        $region36: #{tpu_custom_call.1} parent=31 // pred_fallthru
          _
        // Predicated region
        $region37: #{tpu_custom_call.1} parent=31 // pred_check
          %p182 = pneg %p63
        $region38: #{tpu_custom_call.1} parent=31 // pred_check_branch
          %184 = sbr.rel (%p182) target = $region40
        $region39: #{tpu_custom_call.1} parent=31 // pred_region
          %185 = dma.done [#allocation6], 1024
        $region40: #{tpu_custom_call.1} parent=31 // pred_fallthru
          _
        %s186 = sand.u32 %s29, 1
        %s187 = scalar_lea.sflag [#allocation3], %s186
        %s188 = sand.u32 %s29, 1
        %s189 = smul.addr %s188, 16
        %s190 = scalar_lea.vmem [#allocation2], %s189
        %p191 = pneg %p42
        %p192 = pneg %p39
        %p193 = pneg %p63
        %p194 = pneg %p60
        %p195 = pneg %p84
        %p196 = pneg %p81
        %p197 = pneg %p110
        %p198 = pneg %p107
        %s199 = sand.u32 %s97, 1
        %s200 = scalar_lea.sflag [#allocation4], %s199
        %s201 = sand.u32 %s97, 1
        %s202 = smul.addr %s201, 16
        %s203 = scalar_lea.vmem [#allocation7], %s202
        %s204 = smul.u32 2, %s21
        %s205 = smul.u32 2, %s21
        %v206 = vld [vmem:[%s177] sm:$0xff]
        %v207 = vld [vmem:[%s177 + $0x8] sm:$0xff]
        %v208 = vld [vmem:[#allocation5] sm:$0xff]
        %v209 = vld [vmem:[#allocation5 + $0x8] sm:$0xff]
        %v210 = vld [vmem:[#allocation5 + $0x10] sm:$0xff]
        %v211 = vld [vmem:[#allocation5 + $0x18] sm:$0xff]
        %v212 = vld [vmem:[#allocation5 + $0x20] sm:$0xff]
        %v213 = vld [vmem:[#allocation5 + $0x28] sm:$0xff]
        %v214 = vld [vmem:[#allocation5 + $0x30] sm:$0xff]
        %v215 = vld [vmem:[#allocation5 + $0x38] sm:$0xff]
        %v216 = vld [vmem:[%s2] sm:$0x1]
        %v218 = vlaneseq
        %v219 = vshrl.u32 %v218, 7
        %v220 = vsub.s32 0, %v219
        %v221 = vrot.slane %v216, %v220
        %vm223 = vcmask 523264
        %v225 = vsel %vm223, %v206, 0
        %v228 = vsel %vm223, %v207, 0
        %230 = vmatprep.subr.mxu0 0.0
        %231 = vmatpush1.msra.mxu0 0.0
        %232 = vmatprep.subr.mxu0 0.0
        %233 = vmatpush1.msra.mxu0 0.0
        %234 = vmatprep.subr.mxu0 0.0
        %235 = vmatpush1.msra.mxu0 0.0
        %236 = vmatprep.subr.mxu0 0.0
        %237 = vmatpush1.msra.mxu0 0.0
        %238 = vmatprep.subr.mxu0 0.0
        %239 = vmatpush1.msra.mxu0 0.0
        %240 = vmatprep.subr.mxu0 0.0
        %241 = vmatpush1.msra.mxu0 0.0
        %242 = vmatprep.subr.mxu0 0.0
        %243 = vmatpush1.msra.mxu0 0.0
        %244 = vmatprep.subr.mxu0 0.0
        %245 = vmatpush1.msra.mxu0 0.0
        %246 = vmatprep.subr.mxu0 0.0
        %247 = vmatpush1.msra.mxu0 %v215
        %248 = vmatprep.subr.mxu0 0.0
        %249 = vmatpush1.msra.mxu0 %v214
        %250 = vmatprep.subr.mxu0 0.0
        %251 = vmatpush1.msra.mxu0 %v213
        %252 = vmatprep.subr.mxu0 0.0
        %253 = vmatpush1.msra.mxu0 %v212
        %254 = vmatprep.subr.mxu0 0.0
        %255 = vmatpush1.msra.mxu0 %v211
        %256 = vmatprep.subr.mxu0 0.0
        %257 = vmatpush1.msra.mxu0 %v210
        %258 = vmatprep.subr.mxu0 0.0
        %259 = vmatpush1.msra.mxu0 %v209
        %260 = vmatprep.subr.mxu0 0.0
        %261 = vmatpush1.msra.mxu0 %v208
        %262 = vmatprep.subr.mxu0 0.0
        %263 = vmatpush2.msra.mxu0 0.0
        %264 = vmatprep.subr.mxu0 0.0
        %265 = vmatpush2.msra.mxu0 0.0
        %266 = vmatprep.subr.mxu0 0.0
        %267 = vmatpush2.msra.mxu0 0.0
        %268 = vmatprep.subr.mxu0 0.0
        %269 = vmatpush2.msra.mxu0 0.0
        %270 = vmatprep.subr.mxu0 0.0
        %271 = vmatpush2.msra.mxu0 0.0
        %272 = vmatprep.subr.mxu0 0.0
        %273 = vmatpush2.msra.mxu0 0.0
        %274 = vmatprep.subr.mxu0 0.0
        %275 = vmatpush2.msra.mxu0 0.0
        %276 = vmatprep.subr.mxu0 0.0
        %277 = vmatpush2.msra.mxu0 0.0
        %278 = vmatprep.subr.mxu0 0.0
        %279 = vmatpush2.msra.mxu0 0.0
        %280 = vmatprep.subr.mxu0 0.0
        %281 = vmatpush2.msra.mxu0 0.0
        %282 = vmatprep.subr.mxu0 0.0
        %283 = vmatpush2.msra.mxu0 0.0
        %284 = vmatprep.subr.mxu0 0.0
        %285 = vmatpush2.msra.mxu0 0.0
        %286 = vmatprep.subr.mxu0 0.0
        %287 = vmatpush2.msra.mxu0 0.0
        %288 = vmatprep.subr.mxu0 0.0
        %289 = vmatpush2.msra.mxu0 0.0
        %290 = vmatprep.subr.mxu0 0.0
        %291 = vmatpush2.msra.mxu0 0.0
        %292 = vmatprep.subr.mxu0 0.0
        %293 = vmatpush2.msra.mxu0 0.0
        %294 = vmatprep.mubr.f32.mxu0 0.0
        %295 = vmatmul.mubr.f32.gmra.mxu0 %v225
        %v296 = vpop.f32.mrf.mxu0
        %v297 = vadd.f32 %v221, %v296
        %v298 = vpop.f32.mrf.mxu0
        %299 = vmatprep.mubr.f32.mxu0 0.0
        %300 = vmatmul.mubr.f32.gmra.mxu0 %v228
        %v301 = vpop.f32.mrf.mxu0
        %v302 = vadd.f32 %v221, %v301
        %v303 = vpop.f32.mrf.mxu0
        %304 = vdwg.mxu0
        %305 = vst [vmem:[%s203] sm:$0xff] %v297
        %306 = vst [vmem:[%s203 + $0x8] sm:$0xff] %v302
        %s307 = sand.u32 %s97, 1
        %s308 = scalar_lea.sflag [#allocation4], %s307
        %s309 = sand.u32 %s97, 1
        %s310 = smul.addr %s309, 16
        %s311 = scalar_lea.vmem [#allocation7], %s310
        // Predicated region
        $region41: #{tpu_custom_call.1} parent=31 // pred_check
          %p312 = pneg %p107
        $region42: #{tpu_custom_call.1} parent=31 // pred_check_branch
          %314 = sbr.rel (%p312) target = $region44
        $region43: #{tpu_custom_call.1} parent=31 // pred_region
          %s315 = smul.u32 2, %s21
          %s317 = ssub.s32 256, 256
          %318 = vsyncadd %s308, %s317
          %s319 = smul.addr %s315, 128
          %s320 = scalar_lea.hbm %s3, %s319
          %s321 = sshll.u32 %s311, 4
          %s322 = int_to_ptr.vmem [resolvable:$true] %s321
          %327 = dma.vmem_to_hbm [thread:$0]  %s322, 256, %s320, %s308, 128, 128, 8
        $region44: #{tpu_custom_call.1} parent=31 // pred_fallthru
          _
      $region32: #{tpu_custom_call.1} parent=5 // pred_fallthru
        _
      %p328 = scmp.le.s32.totalorder 2, %s16
      // Predicated region
      $region45: #{tpu_custom_call.1} parent=5 // pred_check
        %p329 = pneg %p328
      $region46: #{tpu_custom_call.1} parent=5 // pred_check_branch
        %331 = sbr.rel (%p329) target = $region48
      $region47: #{tpu_custom_call.1} parent=5 // pred_region
        %s332 = ssub.s32 %s16, 2
        // Predicated region
        $region49: #{tpu_custom_call.1} parent=47 // pred_check
          %p333 = pneg %p113
        $region50: #{tpu_custom_call.1} parent=47 // pred_check_branch
          %335 = sbr.rel (%p333) target = $region52
        $region51: #{tpu_custom_call.1} parent=47 // pred_region
          %s336 = sand.u32 %s98, 1
          %s337 = scalar_lea.sflag [#allocation4], %s336
          %s338 = sand.u32 %s98, 1
          %s339 = smul.addr %s338, 16
          %s340 = scalar_lea.vmem [#allocation7], %s339
          %341 = dma.done %s337, 256
        $region52: #{tpu_custom_call.1} parent=47 // pred_fallthru
          _
      $region48: #{tpu_custom_call.1} parent=5 // pred_fallthru
        _
    $region6: #{tpu_custom_call.1} parent=1 // loop_footer
      %s20 = sadd.s32 1, %s16
    $region7: #{tpu_custom_call.1} parent=1 // loop_footer_branch
      %15 = sbr.rel target = $region3
    $region8: #{tpu_custom_call.1} parent=1 // loop_exit
      _
    %342 = vsyncpa [#allocation3], 1
    %s343 = scalar_lea.sflag [#allocation3], 1
    %344 = vsyncpa %s343, 1
    %345 = vsyncpa [#allocation6], 1
    %346 = vsyncpa [#allocation4], 1
    %s347 = scalar_lea.sflag [#allocation4], 1
    %348 = vsyncpa %s347, 1

</llo_original>
